<compile_context>
chip_gen: v5e
topology: v5e:2x2
jax: 0.10.0
libtpu: 0.0.40
codegen_flags: <defaults>
</compile_context>

<pallas_src>
import jax
import jax.numpy as jnp
from jax.experimental import pallas as pl
from jax.experimental.pallas import tpu as pltpu

LANE = 128
SUBLANE = 8


def _round_up(x, m):
    return ((x + m - 1) // m) * m


def _vmem_budget_bytes():
    """Usable VMEM budget, leaving headroom for Mosaic internal scratch.
    ~48 MiB on v7x (64 MiB physical), ~96 MiB on v5e/v6e (128 MiB physical)."""
    cap = 64 << 20  # conservative default: assume v7x
    try:
        info = pltpu.get_tpu_info()
        cap = int(getattr(info, "vmem_capacity_bytes", cap))
    except Exception:
        pass
    return (cap * 3) // 4


def _make_kernel(bf16_compute):
    def mlp_kernel(x_ref, w1_ref, b1_ref, w2_ref, b2_ref, o_ref):
        x = x_ref[...]
        w1 = w1_ref[...]
        w2 = w2_ref[...]
        if bf16_compute:
            # Full-rate MXU path on v6e/v7x: bf16 inputs, f32 accumulation.
            x = x.astype(jnp.bfloat16)
            w1 = w1.astype(jnp.bfloat16)
            w2 = w2.astype(jnp.bfloat16)
        # fc1: x @ W1 + b1 (f32 accumulation on the MXU)
        h = jnp.dot(x, w1, preferred_element_type=jnp.float32)
        h = h + b1_ref[...].astype(jnp.float32)  # (1, hidden) broadcasts over rows
        # tanh (EUP). bf16 tanh roughly doubles EUP throughput on v6e/v7x and
        # halves the (TB, hidden) intermediate pressure; keep f32 otherwise.
        if bf16_compute:
            h = jnp.tanh(h.astype(jnp.bfloat16))
        else:
            h = jnp.tanh(h)
            h = h.astype(w2.dtype)  # bf16 second matmul if weights are bf16
        # fc2: h @ W2 + b2
        y = jnp.dot(h, w2, preferred_element_type=jnp.float32)
        y = y + b2_ref[...].astype(jnp.float32)  # (1, out_pad)
        o_ref[...] = y.astype(o_ref.dtype)

    return mlp_kernel


def prepare_params(w1, b1, w2, b2):
    """One-time layout prep (keep layout work off the per-call path).

    w1: (in_dim, hidden)  b1: (hidden,)
    w2: (hidden, out_dim) b2: (out_dim,)

    * w1 rows (K of fc1) zero-padded to a multiple of 128 lanes.
    * w2/b2 columns (out_dim) zero-padded to 128 lanes -> unmasked output vst.
    """
    in_dim, hidden = w1.shape
    out_dim = w2.shape[-1]
    in_pad = _round_up(in_dim, LANE)
    out_pad = _round_up(out_dim, LANE)
    if in_pad != in_dim:
        w1 = jnp.pad(w1, ((0, in_pad - in_dim), (0, 0)))
    if out_pad != out_dim:
        w2 = jnp.pad(w2, ((0, 0), (0, out_pad - out_dim)))
        b2 = jnp.pad(b2.reshape(1, -1), ((0, 0), (0, out_pad - out_dim)))
    return dict(
        w1=w1, b1=b1.reshape(1, hidden), w2=w2, b2=b2.reshape(1, out_pad),
        in_dim=in_dim, in_pad=in_pad, hidden=hidden,
        out_dim=out_dim, out_pad=out_pad,
    )


def simple_forward(x, params, *, block_b=512, bf16_compute=False):
    """Fused 2-layer MLP: tanh(x @ w1 + b1) @ w2 + b2.  x: (B, in_dim)."""
    B, in_dim = x.shape
    assert in_dim == params["in_dim"]
    in_pad = params["in_pad"]
    hidden = params["hidden"]
    out_dim = params["out_dim"]
    out_pad = params["out_pad"]
    w1, b1, w2, b2 = params["w1"], params["b1"], params["w2"], params["b2"]

    # Lane-dense K for fc1: zero-pad x's feature axis (mathematically exact).
    if in_pad != in_dim:
        x = jnp.pad(x, ((0, 0), (0, in_pad - in_dim)))
    xdt = jnp.dtype(x.dtype)

    # Batch tile: sublane-aligned; no batch padding -- the grid is ceil(B/TB)
    # and out-of-range rows of the last block are simply never written back.
    TB = min(_round_up(block_b, SUBLANE), _round_up(B, SUBLANE))

    # VMEM accounting: x/out tiles double-buffered, weights single-buffered
    # (constant index maps + Buffered(1)), plus the (TB, hidden) f32 intermediate.
    w_bytes = sum(int(a.size) * a.dtype.itemsize for a in (w1, b1, w2, b2))

    def footprint(tb):
        return (2 * tb * in_pad * xdt.itemsize
                + 2 * tb * out_pad * xdt.itemsize
                + tb * hidden * 4
                + w_bytes)

    budget = _vmem_budget_bytes()
    while TB > SUBLANE and footprint(TB) > budget:
        TB = _round_up(TB // 2, SUBLANE)
    # TODO(synk): if the weights alone exceed the VMEM budget (very large
    # hidden on v7x's 64 MiB), add a second "arbitrary" grid axis over hidden
    # with a (TB, out_pad) f32 accumulator and stream w1 columns / w2 rows
    # instead of keeping them fully resident.

    grid = (pl.cdiv(B, TB),)

    def _resident(shape):
        # Constant index map -> stays in VMEM across grid steps; single buffer
        # since it never changes (double-buffering would double its footprint).
        idx = lambda i: (0,) * len(shape)
        try:
            return pl.BlockSpec(shape, idx, pipeline_mode=pl.Buffered(1))
        except TypeError:  # very old JAX without pipeline_mode
            return pl.BlockSpec(shape, idx)

    cost = pl.CostEstimate(
        flops=2 * B * (in_pad * hidden + hidden * out_pad),
        transcendentals=B * hidden,
        bytes_accessed=int(B * in_pad * xdt.itemsize
                           + w_bytes
                           + B * out_pad * xdt.itemsize),
    )

    vmem_limit = int(min(budget, max(32 << 20, 2 * footprint(TB))))

    y = pl.pallas_call(
        _make_kernel(bf16_compute),
        out_shape=jax.ShapeDtypeStruct((B, out_pad), x.dtype),
        grid_spec=pltpu.PrefetchScalarGridSpec(
            num_scalar_prefetch=0,
            grid=grid,
            in_specs=[
                # x tile marches down the batch axis (auto double-buffered).
                pl.BlockSpec((TB, in_pad), lambda i: (i, 0)),
                # Weights / biases: resident, single-buffered.
                _resident((in_pad, hidden)),
                _resident((1, hidden)),
                _resident((hidden, out_pad)),
                _resident((1, out_pad)),
            ],
            out_specs=pl.BlockSpec((TB, out_pad), lambda i: (i, 0)),
        ),
        compiler_params=pltpu.CompilerParams(
            # Batch tiles are independent -> megacore sharding on v7x.
            dimension_semantics=("parallel",),
            vmem_limit_bytes=vmem_limit,
        ),
        cost_estimate=cost,
    )(x, w1, b1, w2, b2)

    # Strip lane padding off the output.
    return y[:, :out_dim]


def init_params(key, in_dim, out_dim, dtype=jnp.float32):
    """Exactly the PyTorch __init__: fc1.weight ~ N(0, in_dim**-0.5),
    fc1.bias = 0, fc2.weight = 0, fc2.bias = 0 (weights pre-transposed)."""
    hidden = out_dim * 8
    w1_t = jax.random.normal(key, (in_dim, hidden), dtype) * (in_dim ** -0.5)
    b1 = jnp.zeros((hidden,), dtype)
    w2_t = jnp.zeros((hidden, out_dim), dtype)
    b2 = jnp.zeros((out_dim,), dtype)
    return w1_t, b1, w2_t, b2


if __name__ == "__main__":
    in_dim, out_dim = 32, 16      # hidden = out_dim * 8 = 128
    key = jax.random.PRNGKey(0)
    kx, kw, kw2, kb2, kx2 = jax.random.split(key, 5)

    # 1) Exact PyTorch-init parameters (fc2 weight & bias are zero).
    w1, b1, w2, b2 = init_params(kw, in_dim, out_dim)
    params = prepare_params(w1, b1, w2, b2)

    x = jax.random.normal(kx, (8, in_dim), jnp.float32)
    y = simple_forward(x, params)
    jax.block_until_ready(y)
    ref = jnp.tanh(x @ w1 + b1) @ w2 + b2
    assert y.shape == (8, out_dim)
    assert jnp.allclose(y, ref, atol=1e-5), "mismatch vs reference (init params)"

    # 2) Non-trivial fc2 + ragged batch: exercises the second matmul, the
    #    cdiv grid (partial last block) and weight residency across steps.
    w2r = jax.random.normal(kw2, (out_dim * 8, out_dim), jnp.float32) * 0.1
    b2r = jax.random.normal(kb2, (out_dim,), jnp.float32) * 0.1
    params_r = prepare_params(w1, b1, w2r, b2r)
    xr = jax.random.normal(kx2, (13, in_dim), jnp.float32)
    y2 = simple_forward(xr, params_r, block_b=8)   # grid = cdiv(13, 8) = 2
    jax.block_until_ready(y2)
    ref2 = jnp.tanh(xr @ w1 + b1) @ w2r + b2r
    assert y2.shape == (13, out_dim)
    assert jnp.allclose(y2, ref2, atol=1e-5), "mismatch (random fc2, ragged batch)"

    # 3) bf16 MXU/EUP fast path (v6e/v7x) with f32 accumulation.
    y3 = simple_forward(xr, params_r, bf16_compute=True)
    jax.block_until_ready(y3)
    assert jnp.allclose(y3, ref2, atol=5e-2, rtol=5e-2), "mismatch (bf16 path)"

    print("KERNEL_OK")
</pallas_src>

<mosaic_0001>
module attributes {stable_mosaic.version = 11 : i64} {
  func.func @mlp_kernel(%arg0: i32, %arg1: memref<8x128xf32, #tpu.memory_space<vmem>>, %arg2: memref<128x128xf32, #tpu.memory_space<vmem>>, %arg3: memref<1x128xf32, #tpu.memory_space<vmem>>, %arg4: memref<128x128xf32, #tpu.memory_space<vmem>>, %arg5: memref<1x128xf32, #tpu.memory_space<vmem>>, %arg6: memref<8x128xf32, #tpu.memory_space<vmem>>) attributes {dimension_semantics = [#tpu.dimension_semantics<parallel>], iteration_bounds = array<i64: 1>, scalar_prefetch = 0 : i64, scratch_operands = 0 : i64, tpu.core_type = #tpu.core_type<tc>, window_params = [{transform_indices = @transform_0, window_bounds = array<i64: 8, 128>}, {pipeline_mode = #tpu.pipeline_mode<synchronous>, transform_indices = @transform_1, window_bounds = array<i64: 128, 128>}, {pipeline_mode = #tpu.pipeline_mode<synchronous>, transform_indices = @transform_2, window_bounds = array<i64: 1, 128>}, {pipeline_mode = #tpu.pipeline_mode<synchronous>, transform_indices = @transform_3, window_bounds = array<i64: 128, 128>}, {pipeline_mode = #tpu.pipeline_mode<synchronous>, transform_indices = @transform_4, window_bounds = array<i64: 1, 128>}, {transform_indices = @transform_5, window_bounds = array<i64: 8, 128>}]} {
    %c0 = arith.constant 0 : index
    %c0_0 = arith.constant 0 : index
    %0 = vector.load %arg1[%c0, %c0_0] : memref<8x128xf32, #tpu.memory_space<vmem>>, vector<8x128xf32>
    %c0_1 = arith.constant 0 : index
    %c0_2 = arith.constant 0 : index
    %1 = vector.load %arg2[%c0_1, %c0_2] : memref<128x128xf32, #tpu.memory_space<vmem>>, vector<128x128xf32>
    %c0_3 = arith.constant 0 : index
    %c0_4 = arith.constant 0 : index
    %2 = vector.load %arg4[%c0_3, %c0_4] : memref<128x128xf32, #tpu.memory_space<vmem>>, vector<128x128xf32>
    %cst = arith.constant dense<0.000000e+00> : vector<8x128xf32>
    %3 = tpu.matmul %0, %1, %cst {dimension_numbers = #tpu.dot_dimension_numbers<[1], [0], [0], [1], [0, 0, 1, 1], [], []>} : vector<8x128xf32>, vector<128x128xf32>, vector<8x128xf32> -> vector<8x128xf32>
    %c0_5 = arith.constant 0 : index
    %c0_6 = arith.constant 0 : index
    %4 = vector.load %arg3[%c0_5, %c0_6] : memref<1x128xf32, #tpu.memory_space<vmem>>, vector<1x128xf32>
    %5 = vector.broadcast %4 : vector<1x128xf32> to vector<8x128xf32>
    %6 = arith.addf %3, %5 : vector<8x128xf32>
    %7 = math.tanh %6 : vector<8x128xf32>
    %cst_7 = arith.constant dense<0.000000e+00> : vector<8x128xf32>
    %8 = tpu.matmul %7, %2, %cst_7 {dimension_numbers = #tpu.dot_dimension_numbers<[1], [0], [0], [1], [0, 0, 1, 1], [], []>} : vector<8x128xf32>, vector<128x128xf32>, vector<8x128xf32> -> vector<8x128xf32>
    %c0_8 = arith.constant 0 : index
    %c0_9 = arith.constant 0 : index
    %9 = vector.load %arg5[%c0_8, %c0_9] : memref<1x128xf32, #tpu.memory_space<vmem>>, vector<1x128xf32>
    %10 = vector.broadcast %9 : vector<1x128xf32> to vector<8x128xf32>
    %11 = arith.addf %8, %10 : vector<8x128xf32>
    %c0_10 = arith.constant 0 : index
    %c0_11 = arith.constant 0 : index
    %12 = vector.load %arg6[%c0_10, %c0_11] : memref<8x128xf32, #tpu.memory_space<vmem>>, vector<8x128xf32>
    tpu.vector_store %arg6[%c0_10, %c0_11], %11 {strides = array<i32>} : memref<8x128xf32, #tpu.memory_space<vmem>>, vector<8x128xf32>,
    return
  }
  func.func @transform_0(%arg0: i32) -> (i32, i32) {
    %c0_i32 = arith.constant 0 : i32
    %c0_i32_0 = arith.constant 0 : i32
    return %arg0, %c0_i32 : i32, i32
  }
  func.func @transform_1(%arg0: i32) -> (i32, i32) {
    %c0_i32 = arith.constant 0 : i32
    %c0_i32_0 = arith.constant 0 : i32
    %c0_i32_1 = arith.constant 0 : i32
    return %c0_i32, %c0_i32_0 : i32, i32
  }
  func.func @transform_2(%arg0: i32) -> (i32, i32) {
    %c0_i32 = arith.constant 0 : i32
    %c0_i32_0 = arith.constant 0 : i32
    %c0_i32_1 = arith.constant 0 : i32
    return %c0_i32, %c0_i32_0 : i32, i32
  }
  func.func @transform_3(%arg0: i32) -> (i32, i32) {
    %c0_i32 = arith.constant 0 : i32
    %c0_i32_0 = arith.constant 0 : i32
    %c0_i32_1 = arith.constant 0 : i32
    return %c0_i32, %c0_i32_0 : i32, i32
  }
  func.func @transform_4(%arg0: i32) -> (i32, i32) {
    %c0_i32 = arith.constant 0 : i32
    %c0_i32_0 = arith.constant 0 : i32
    %c0_i32_1 = arith.constant 0 : i32
    return %c0_i32, %c0_i32_0 : i32, i32
  }
  func.func @transform_5(%arg0: i32) -> (i32, i32) {
    %c0_i32 = arith.constant 0 : i32
    %c0_i32_0 = arith.constant 0 : i32
    return %arg0, %c0_i32 : i32, i32
  }
}

</mosaic_0001>

<llo_original>
// kernel: tpu_custom_call.1
$region0: #{tpu_custom_call.1}
  #allocation0 [shape = 'u32[]', space=smem, size = 0x4, offset = 0x4, fixed_abs, tag = 'smem constant byte address 0x4 - core index']
  #allocation1 [shape = 'u32[72,128]{1,0:T(1,128)}', space=vmem, size = 0x9000, scoped, tag = 'internal scratch']
  %s0 = inlined_call_operand.hbm [shape: f32[8,128], index: 0, kind: input, shape index: {}]
  %s1 = inlined_call_operand.hbm [shape: f32[128,128], index: 1, kind: input, shape index: {}]
  %s2 = inlined_call_operand.vmem [shape: f32[1,128], index: 2, kind: input, shape index: {}]
  %s3 = inlined_call_operand.hbm [shape: f32[128,128], index: 3, kind: input, shape index: {}]
  %s4 = inlined_call_operand.vmem [shape: f32[1,128], index: 4, kind: input, shape index: {}]
  %s5 = inlined_call_operand.hbm [shape: f32[8,128], index: 5, kind: output, shape index: {}]
  %s6 = sld [smem:[#allocation0]]
  $region42: #{tpu_custom_call.1} parent=0
    _
  %s8 = ssub.s32 1, %s6
  %s9 = scalar_select 0, %s8, %s6
  $region1: #{tpu_custom_call.1} parent=0
    #allocation2 [shape = 'u8[4096]{0}', space=vmem, size = 0x1000, scoped, tag = 'input window, operand 0, single buffered']
    #allocation3 [shape = 's32[1]{0}', space=sflag, size = 0x4, scoped, tag = 'scoped memory for tpu_custom_call.1']
    #allocation4 [shape = 's32[1]{0}', space=sflag, size = 0x4, scoped, tag = 'scoped memory for tpu_custom_call.1']
    #allocation5 [shape = 'u8[65536]{0}', space=vmem, size = 0x10000, scoped, tag = 'input window, operand 1, single buffered']
    #allocation6 [shape = 's32[1]{0}', space=sflag, size = 0x4, scoped, tag = 'scoped memory for tpu_custom_call.1']
    #allocation7 [shape = 'u8[65536]{0}', space=vmem, size = 0x10000, scoped, tag = 'input window, operand 3, single buffered']
    #allocation8 [shape = 'u8[4096]{0}', space=vmem, size = 0x1000, scoped, tag = 'output window, operand 0, single buffered']
    %10 = vsyncpa [#allocation3], 0
    %11 = vsyncpa [#allocation6], 0
    %12 = vsyncpa [#allocation4], 0
    // Predicated region
    $region2: #{tpu_custom_call.1} parent=1 // pred_check
      _
    $region3: #{tpu_custom_call.1} parent=1 // pred_check_branch
      %14 = sbr.rel (0) target = $region5
    $region4: #{tpu_custom_call.1} parent=1 // pred_region
      %16 = vsyncadd [#allocation3], 0
      %s18 = sshll.u32 %s0, 4
      %s19 = int_to_ptr.hbm [resolvable:$true] %s18
      %s20 = sshll.u32 [#allocation2], 4
      %s21 = int_to_ptr.vmem [resolvable:$true] %s20
      %23 = dma.hbm_to_vmem [thread:$0]  %s19, 128, %s21, [#allocation3]
    $region5: #{tpu_custom_call.1} parent=1 // pred_fallthru
      _
    // Predicated region
    $region6: #{tpu_custom_call.1} parent=1 // pred_check
      _
    $region7: #{tpu_custom_call.1} parent=1 // pred_check_branch
      %25 = sbr.rel (0) target = $region9
    $region8: #{tpu_custom_call.1} parent=1 // pred_region
      %27 = vsyncadd [#allocation6], 0
      %s28 = sshll.u32 %s1, 4
      %s29 = int_to_ptr.hbm [resolvable:$true] %s28
      %s30 = sshll.u32 [#allocation5], 4
      %s31 = int_to_ptr.vmem [resolvable:$true] %s30
      %36 = dma.hbm_to_vmem [thread:$0]  %s29, 2048, %s31, [#allocation6], 128, 128, 8
    $region9: #{tpu_custom_call.1} parent=1 // pred_fallthru
      _
    // Predicated region
    $region10: #{tpu_custom_call.1} parent=1 // pred_check
      _
    $region11: #{tpu_custom_call.1} parent=1 // pred_check_branch
      %38 = sbr.rel (0) target = $region13
    $region12: #{tpu_custom_call.1} parent=1 // pred_region
      _
    $region13: #{tpu_custom_call.1} parent=1 // pred_fallthru
      _
    // Predicated region
    $region14: #{tpu_custom_call.1} parent=1 // pred_check
      _
    $region15: #{tpu_custom_call.1} parent=1 // pred_check_branch
      %40 = sbr.rel (0) target = $region17
    $region16: #{tpu_custom_call.1} parent=1 // pred_region
      %42 = vsyncadd [#allocation6], 0
      %s43 = sshll.u32 %s3, 4
      %s44 = int_to_ptr.hbm [resolvable:$true] %s43
      %s45 = sshll.u32 [#allocation7], 4
      %s46 = int_to_ptr.vmem [resolvable:$true] %s45
      %51 = dma.hbm_to_vmem [thread:$0]  %s44, 2048, %s46, [#allocation6], 128, 128, 8
    $region17: #{tpu_custom_call.1} parent=1 // pred_fallthru
      _
    // Predicated region
    $region18: #{tpu_custom_call.1} parent=1 // pred_check
      _
    $region19: #{tpu_custom_call.1} parent=1 // pred_check_branch
      %53 = sbr.rel (0) target = $region21
    $region20: #{tpu_custom_call.1} parent=1 // pred_region
      _
    $region21: #{tpu_custom_call.1} parent=1 // pred_fallthru
      _
    // Predicated region
    $region22: #{tpu_custom_call.1} parent=1 // pred_check
      _
    $region23: #{tpu_custom_call.1} parent=1 // pred_check_branch
      %55 = sbr.rel (0) target = $region25
    $region24: #{tpu_custom_call.1} parent=1 // pred_region
      %57 = dma.done [#allocation3], 128
    $region25: #{tpu_custom_call.1} parent=1 // pred_fallthru
      _
    // Predicated region
    $region26: #{tpu_custom_call.1} parent=1 // pred_check
      _
    $region27: #{tpu_custom_call.1} parent=1 // pred_check_branch
      %59 = sbr.rel (0) target = $region29
    $region28: #{tpu_custom_call.1} parent=1 // pred_region
      %61 = dma.done [#allocation6], 2048
    $region29: #{tpu_custom_call.1} parent=1 // pred_fallthru
      _
    // Predicated region
    $region30: #{tpu_custom_call.1} parent=1 // pred_check
      _
    $region31: #{tpu_custom_call.1} parent=1 // pred_check_branch
      %63 = sbr.rel (0) target = $region33
    $region32: #{tpu_custom_call.1} parent=1 // pred_region
      %65 = dma.done [#allocation6], 2048
    $region33: #{tpu_custom_call.1} parent=1 // pred_fallthru
      _
    %v66 = vld [vmem:[#allocation2] sm:$0xff]
    %v67 = vld [vmem:[#allocation5] sm:$0xff]
    %v68 = vld [vmem:[#allocation5 + $0x8] sm:$0xff]
    %v69 = vld [vmem:[#allocation5 + $0x10] sm:$0xff]
    %v70 = vld [vmem:[#allocation5 + $0x18] sm:$0xff]
    %v71 = vld [vmem:[#allocation5 + $0x20] sm:$0xff]
    %v72 = vld [vmem:[#allocation5 + $0x28] sm:$0xff]
    %v73 = vld [vmem:[#allocation5 + $0x30] sm:$0xff]
    %v74 = vld [vmem:[#allocation5 + $0x38] sm:$0xff]
    %v75 = vld [vmem:[#allocation5 + $0x40] sm:$0xff]
    %v76 = vld [vmem:[#allocation5 + $0x48] sm:$0xff]
    %v77 = vld [vmem:[#allocation5 + $0x50] sm:$0xff]
    %v78 = vld [vmem:[#allocation5 + $0x58] sm:$0xff]
    %v79 = vld [vmem:[#allocation5 + $0x60] sm:$0xff]
    %v80 = vld [vmem:[#allocation5 + $0x68] sm:$0xff]
    %v81 = vld [vmem:[#allocation5 + $0x70] sm:$0xff]
    %v82 = vld [vmem:[#allocation5 + $0x78] sm:$0xff]
    %v83 = vld [vmem:[#allocation7] sm:$0xff]
    %v84 = vld [vmem:[#allocation7 + $0x8] sm:$0xff]
    %v85 = vld [vmem:[#allocation7 + $0x10] sm:$0xff]
    %v86 = vld [vmem:[#allocation7 + $0x18] sm:$0xff]
    %v87 = vld [vmem:[#allocation7 + $0x20] sm:$0xff]
    %v88 = vld [vmem:[#allocation7 + $0x28] sm:$0xff]
    %v89 = vld [vmem:[#allocation7 + $0x30] sm:$0xff]
    %v90 = vld [vmem:[#allocation7 + $0x38] sm:$0xff]
    %v91 = vld [vmem:[#allocation7 + $0x40] sm:$0xff]
    %v92 = vld [vmem:[#allocation7 + $0x48] sm:$0xff]
    %v93 = vld [vmem:[#allocation7 + $0x50] sm:$0xff]
    %v94 = vld [vmem:[#allocation7 + $0x58] sm:$0xff]
    %v95 = vld [vmem:[#allocation7 + $0x60] sm:$0xff]
    %v96 = vld [vmem:[#allocation7 + $0x68] sm:$0xff]
    %v97 = vld [vmem:[#allocation7 + $0x70] sm:$0xff]
    %v98 = vld [vmem:[#allocation7 + $0x78] sm:$0xff]
    %v99 = vld [vmem:[%s2] sm:$0x1]
    %v101 = vperm.slane %v99, 0
    %103 = vmatpush.msra.mxu0 %v82
    %104 = vmatpush.msra.mxu0 %v81
    %105 = vmatpush.msra.mxu0 %v80
    %106 = vmatpush.msra.mxu0 %v79
    %107 = vmatpush.msra.mxu0 %v78
    %108 = vmatpush.msra.mxu0 %v77
    %109 = vmatpush.msra.mxu0 %v76
    %110 = vmatpush.msra.mxu0 %v75
    %111 = vmatpush.msra.mxu0 %v74
    %112 = vmatpush.msra.mxu0 %v73
    %113 = vmatpush.msra.mxu0 %v72
    %114 = vmatpush.msra.mxu0 %v71
    %115 = vmatpush.msra.mxu0 %v70
    %116 = vmatpush.msra.mxu0 %v69
    %117 = vmatpush.msra.mxu0 %v68
    %118 = vmatpush.msra.mxu0 %v67
    %119 = vmatmul.f32.gmra.mxu0 %v66
    %v120 = vpop.f32.mrf.mxu0
    %v121 = vadd.f32 %v101, %v120
    %122 = vdwg.mxu0
    %v123 = vtanh.pop %v121
    %v124 = vld [vmem:[%s4] sm:$0x1]
    %v126 = vperm.slane %v124, 0
    %128 = vmatpush.msra.mxu0 %v98
    %129 = vmatpush.msra.mxu0 %v97
    %130 = vmatpush.msra.mxu0 %v96
    %131 = vmatpush.msra.mxu0 %v95
    %132 = vmatpush.msra.mxu0 %v94
    %133 = vmatpush.msra.mxu0 %v93
    %134 = vmatpush.msra.mxu0 %v92
    %135 = vmatpush.msra.mxu0 %v91
    %136 = vmatpush.msra.mxu0 %v90
    %137 = vmatpush.msra.mxu0 %v89
    %138 = vmatpush.msra.mxu0 %v88
    %139 = vmatpush.msra.mxu0 %v87
    %140 = vmatpush.msra.mxu0 %v86
    %141 = vmatpush.msra.mxu0 %v85
    %142 = vmatpush.msra.mxu0 %v84
    %143 = vmatpush.msra.mxu0 %v83
    %144 = vmatmul.f32.gmra.mxu0 %v123
    %v145 = vpop.f32.mrf.mxu0
    %v146 = vadd.f32 %v126, %v145
    %147 = vdwg.mxu0
    %148 = vst [vmem:[#allocation8] sm:$0xff] %v146
    // Predicated region
    $region34: #{tpu_custom_call.1} parent=1 // pred_check
      _
    $region35: #{tpu_custom_call.1} parent=1 // pred_check_branch
      %150 = sbr.rel (0) target = $region37
    $region36: #{tpu_custom_call.1} parent=1 // pred_region
      %152 = vsyncadd [#allocation4], 0
      %s154 = sshll.u32 [#allocation8], 4
      %s155 = int_to_ptr.vmem [resolvable:$true] %s154
      %s156 = sshll.u32 %s5, 4
      %s157 = int_to_ptr.hbm [resolvable:$true] %s156
      %159 = dma.vmem_to_hbm [thread:$0]  %s155, 128, %s157, [#allocation4]
    $region37: #{tpu_custom_call.1} parent=1 // pred_fallthru
      _
    // Predicated region
    $region38: #{tpu_custom_call.1} parent=1 // pred_check
      _
    $region39: #{tpu_custom_call.1} parent=1 // pred_check_branch
      %161 = sbr.rel (0) target = $region41
    $region40: #{tpu_custom_call.1} parent=1 // pred_region
      %163 = dma.done [#allocation4], 128
    $region41: #{tpu_custom_call.1} parent=1 // pred_fallthru
      _
    %164 = vsyncpa [#allocation3], 1
    %165 = vsyncpa [#allocation6], 1
    %166 = vsyncpa [#allocation4], 1

</llo_original>
